<compile_context>
chip_gen: v6e
topology: v6e:2x2x1
jax: 0.10.0
libtpu: 0.0.40
codegen_flags: <defaults>
</compile_context>

<pallas_src>
import functools

import jax
import jax.numpy as jnp
from jax import lax
from jax.experimental import pallas as pl
from jax.experimental.pallas import tpu as pltpu


LOG_SD_MIN = -20.0
LOG_SD_MAX = 2.0
BN_EPS = 1e-5


def _mxu_dot(a, b):
    # bf16 operands -> native MXU path on v5e/v6e/v7x, f32 accumulation.
    return jnp.dot(a.astype(jnp.bfloat16), b.astype(jnp.bfloat16),
                   preferred_element_type=jnp.float32)


def policy_kernel(x_ref,
                  w1_ref, b1_ref,
                  w2_ref, b2_ref,
                  w3_ref, b3_ref,
                  gamma_ref, beta_ref,
                  wh_ref, bh_ref,
                  heads_ref, *, num_actions):
    x = x_ref[...]                                              # (B, num_inputs) f32

    # layer1 + ReLU
    h1 = jnp.maximum(_mxu_dot(x, w1_ref[...]) + b1_ref[...], 0.0)
    # layer2 + ReLU
    h2 = jnp.maximum(_mxu_dot(h1, w2_ref[...]) + b2_ref[...], 0.0)
    # layer3 (pre-activation)
    h3 = _mxu_dot(h2, w3_ref[...]) + b3_ref[...]

    # BatchNorm1d (training-mode batch statistics, biased variance),
    # single-pass variance E[h^2] - mu^2, affine folded into scale/shift.
    mu = jnp.mean(h3, axis=0, keepdims=True)                    # (1, H)
    msq = jnp.mean(h3 * h3, axis=0, keepdims=True)              # (1, H)
    var = jnp.maximum(msq - mu * mu, 0.0)
    scale = gamma_ref[...] * lax.rsqrt(var + BN_EPS)            # (1, H)
    shift = beta_ref[...] - mu * scale
    h3r = jnp.maximum(h3 * scale + shift, 0.0)                  # ReLU after BN

    # fused heads: [mean | log_sd] as one (B, 2A) lane-packed slab.
    heads = _mxu_dot(h3r, wh_ref[...]) + bh_ref[...]
    cols = lax.broadcasted_iota(jnp.int32, heads.shape, 1)
    is_mean = cols < num_actions
    lo = jnp.where(is_mean, -jnp.inf, LOG_SD_MIN)
    hi = jnp.where(is_mean, jnp.inf, LOG_SD_MAX)
    heads_ref[...] = jnp.clip(heads, lo, hi).astype(heads_ref.dtype)


def policy_forward(state, params):
    """state: (B, num_inputs) f32. params: dict of (in, out) weights and
    (1, out) biases. Returns (mean, log_sd), each (B, num_actions)."""
    B = state.shape[0]
    A = params["wm"].shape[1]

    # Pack the two tiny heads into one matmul / one output slab.
    w_heads = jnp.concatenate([params["wm"], params["ws"]], axis=1)   # (H, 2A)
    b_heads = jnp.concatenate([params["bm"], params["bs"]], axis=1)   # (1, 2A)

    args = (state,
            params["w1"], params["b1"],
            params["w2"], params["b2"],
            params["w3"], params["b3"],
            params["gamma"], params["beta"],
            w_heads, b_heads)

    vmem_spec = pl.BlockSpec(memory_space=pltpu.MemorySpace.VMEM)

    heads = pl.pallas_call(
        functools.partial(policy_kernel, num_actions=A),
        out_shape=jax.ShapeDtypeStruct((B, 2 * A), jnp.float32),
        in_specs=[vmem_spec] * len(args),
        out_specs=vmem_spec,
    )(*args)

    # NOTE: for real RL throughput, batch many env states per call (B >= 256)
    # and/or fold this into the surrounding jitted graph; per-call launch
    # overhead dominates at these shapes.
    return heads[:, :A], heads[:, A:]


def init_params(key, num_inputs, num_actions, hidden_size, init_w=0.003):
    """Deterministic init mirroring PyTorch defaults (uniform +/- 1/sqrt(fan_in)
    for hidden layers, uniform +/- init_w for the two heads, BN gamma=1 beta=0).
    Weights are stored transposed to (in, out) so the kernel computes x @ W."""
    ks = jax.random.split(key, 10)

    def lin(kw, kb, fan_in, fan_out, bound):
        w = jax.random.uniform(kw, (fan_in, fan_out), jnp.float32, -bound, bound)
        b = jax.random.uniform(kb, (1, fan_out), jnp.float32, -bound, bound)
        return w, b

    b1d = 1.0 / (num_inputs ** 0.5)
    bhd = 1.0 / (hidden_size ** 0.5)
    w1, b1 = lin(ks[0], ks[1], num_inputs, hidden_size, b1d)
    w2, b2 = lin(ks[2], ks[3], hidden_size, hidden_size, bhd)
    w3, b3 = lin(ks[4], ks[5], hidden_size, hidden_size, bhd)
    wm, bm = lin(ks[6], ks[7], hidden_size, num_actions, init_w)
    ws, bs = lin(ks[8], ks[9], hidden_size, num_actions, init_w)
    gamma = jnp.ones((1, hidden_size), jnp.float32)
    beta = jnp.zeros((1, hidden_size), jnp.float32)
    return dict(w1=w1, b1=b1, w2=w2, b2=b2, w3=w3, b3=b3,
                gamma=gamma, beta=beta, wm=wm, bm=bm, ws=ws, bs=bs)


def _reference(state, p, matmul_dtype=jnp.float32):
    """Pure-JAX reference. With matmul_dtype=bf16 it mirrors the kernel's MXU
    precision; with f32 it is the exact PyTorch-semantics forward."""
    def dot(a, b):
        return jnp.dot(a.astype(matmul_dtype), b.astype(matmul_dtype),
                       preferred_element_type=jnp.float32)
    h1 = jnp.maximum(dot(state, p["w1"]) + p["b1"], 0.0)
    h2 = jnp.maximum(dot(h1, p["w2"]) + p["b2"], 0.0)
    h3 = dot(h2, p["w3"]) + p["b3"]
    mu = jnp.mean(h3, axis=0, keepdims=True)
    var = jnp.mean((h3 - mu) ** 2, axis=0, keepdims=True)
    h3r = jnp.maximum((h3 - mu) / jnp.sqrt(var + BN_EPS) * p["gamma"] + p["beta"], 0.0)
    mean = dot(h3r, p["wm"]) + p["bm"]
    log_sd = jnp.clip(dot(h3r, p["ws"]) + p["bs"], LOG_SD_MIN, LOG_SD_MAX)
    return mean, log_sd


if __name__ == "__main__":
    key = jax.random.PRNGKey(0)
    k_state, k_params = jax.random.split(key)

    B, NUM_INPUTS, NUM_ACTIONS, HIDDEN = 8, 16, 4, 32
    state = jax.random.normal(k_state, (B, NUM_INPUTS), jnp.float32)
    params = init_params(k_params, NUM_INPUTS, NUM_ACTIONS, HIDDEN)

    mean, log_sd = policy_forward(state, params)
    jax.block_until_ready((mean, log_sd))

    # Precision-matched reference (bf16 MXU operands, f32 accumulation): tight.
    ref_mean_m, ref_log_sd_m = _reference(state, params, matmul_dtype=jnp.bfloat16)
    assert jnp.allclose(mean, ref_mean_m, atol=1e-4, rtol=1e-4)
    assert jnp.allclose(log_sd, ref_log_sd_m, atol=1e-4, rtol=1e-4)

    # Full-f32 module-semantics reference: loose (bf16 MXU rounding only).
    ref_mean, ref_log_sd = _reference(state, params)
    assert jnp.allclose(mean, ref_mean, atol=2e-2, rtol=2e-2)
    assert jnp.allclose(log_sd, ref_log_sd, atol=2e-2, rtol=2e-2)

    assert mean.shape == (B, NUM_ACTIONS) and log_sd.shape == (B, NUM_ACTIONS)

    print("KERNEL_OK")
</pallas_src>

<mosaic_0001>
module attributes {stable_mosaic.version = 11 : i64} {
  func.func @policy_kernel(%arg0: memref<8x16xf32, #tpu.memory_space<vmem>>, %arg1: memref<16x32xf32, #tpu.memory_space<vmem>>, %arg2: memref<1x32xf32, #tpu.memory_space<vmem>>, %arg3: memref<32x32xf32, #tpu.memory_space<vmem>>, %arg4: memref<1x32xf32, #tpu.memory_space<vmem>>, %arg5: memref<32x32xf32, #tpu.memory_space<vmem>>, %arg6: memref<1x32xf32, #tpu.memory_space<vmem>>, %arg7: memref<1x32xf32, #tpu.memory_space<vmem>>, %arg8: memref<1x32xf32, #tpu.memory_space<vmem>>, %arg9: memref<32x8xf32, #tpu.memory_space<vmem>>, %arg10: memref<1x8xf32, #tpu.memory_space<vmem>>, %arg11: memref<8x8xf32, #tpu.memory_space<vmem>>) attributes {dimension_semantics = [], scalar_prefetch = 0 : i64, scratch_operands = 0 : i64, tpu.core_type = #tpu.core_type<tc>} {
    %c0 = arith.constant 0 : index
    %c0_0 = arith.constant 0 : index
    %0 = vector.load %arg0[%c0, %c0_0] : memref<8x16xf32, #tpu.memory_space<vmem>>, vector<8x16xf32>
    %c0_1 = arith.constant 0 : index
    %c0_2 = arith.constant 0 : index
    %1 = vector.load %arg1[%c0_1, %c0_2] : memref<16x32xf32, #tpu.memory_space<vmem>>, vector<16x32xf32>
    %2 = arith.truncf %0 : vector<8x16xf32> to vector<8x16xbf16>
    %3 = arith.truncf %1 : vector<16x32xf32> to vector<16x32xbf16>
    %cst = arith.constant dense<0.000000e+00> : vector<8x32xf32>
    %4 = tpu.matmul %2, %3, %cst {dimension_numbers = #tpu.dot_dimension_numbers<[1], [0], [0], [1], [0, 0, 1, 1], [], []>} : vector<8x16xbf16>, vector<16x32xbf16>, vector<8x32xf32> -> vector<8x32xf32>
    %c0_3 = arith.constant 0 : index
    %c0_4 = arith.constant 0 : index
    %5 = vector.load %arg2[%c0_3, %c0_4] : memref<1x32xf32, #tpu.memory_space<vmem>>, vector<1x32xf32>
    %6 = vector.broadcast %5 : vector<1x32xf32> to vector<8x32xf32>
    %7 = arith.addf %4, %6 : vector<8x32xf32>
    %cst_5 = arith.constant 0.000000e+00 : f32
    %8 = vector.broadcast %cst_5 : f32 to vector<8x32xf32>
    %9 = arith.maximumf %7, %8 : vector<8x32xf32>
    %c0_6 = arith.constant 0 : index
    %c0_7 = arith.constant 0 : index
    %10 = vector.load %arg3[%c0_6, %c0_7] : memref<32x32xf32, #tpu.memory_space<vmem>>, vector<32x32xf32>
    %11 = arith.truncf %9 : vector<8x32xf32> to vector<8x32xbf16>
    %12 = arith.truncf %10 : vector<32x32xf32> to vector<32x32xbf16>
    %cst_8 = arith.constant dense<0.000000e+00> : vector<8x32xf32>
    %13 = tpu.matmul %11, %12, %cst_8 {dimension_numbers = #tpu.dot_dimension_numbers<[1], [0], [0], [1], [0, 0, 1, 1], [], []>} : vector<8x32xbf16>, vector<32x32xbf16>, vector<8x32xf32> -> vector<8x32xf32>
    %c0_9 = arith.constant 0 : index
    %c0_10 = arith.constant 0 : index
    %14 = vector.load %arg4[%c0_9, %c0_10] : memref<1x32xf32, #tpu.memory_space<vmem>>, vector<1x32xf32>
    %15 = vector.broadcast %14 : vector<1x32xf32> to vector<8x32xf32>
    %16 = arith.addf %13, %15 : vector<8x32xf32>
    %cst_11 = arith.constant 0.000000e+00 : f32
    %17 = vector.broadcast %cst_11 : f32 to vector<8x32xf32>
    %18 = arith.maximumf %16, %17 : vector<8x32xf32>
    %c0_12 = arith.constant 0 : index
    %c0_13 = arith.constant 0 : index
    %19 = vector.load %arg5[%c0_12, %c0_13] : memref<32x32xf32, #tpu.memory_space<vmem>>, vector<32x32xf32>
    %20 = arith.truncf %18 : vector<8x32xf32> to vector<8x32xbf16>
    %21 = arith.truncf %19 : vector<32x32xf32> to vector<32x32xbf16>
    %cst_14 = arith.constant dense<0.000000e+00> : vector<8x32xf32>
    %22 = tpu.matmul %20, %21, %cst_14 {dimension_numbers = #tpu.dot_dimension_numbers<[1], [0], [0], [1], [0, 0, 1, 1], [], []>} : vector<8x32xbf16>, vector<32x32xbf16>, vector<8x32xf32> -> vector<8x32xf32>
    %c0_15 = arith.constant 0 : index
    %c0_16 = arith.constant 0 : index
    %23 = vector.load %arg6[%c0_15, %c0_16] : memref<1x32xf32, #tpu.memory_space<vmem>>, vector<1x32xf32>
    %24 = vector.broadcast %23 : vector<1x32xf32> to vector<8x32xf32>
    %25 = arith.addf %22, %24 : vector<8x32xf32>
    %cst_17 = arith.constant dense<0.000000e+00> : vector<32xf32>
    %26 = vector.multi_reduction <add>, %25, %cst_17 [0] : vector<8x32xf32> to vector<32xf32>
    %27 = vector.shape_cast %26 : vector<32xf32> to vector<1x32xf32>
    %cst_18 = arith.constant 8.000000e+00 : f32
    %28 = vector.broadcast %cst_18 : f32 to vector<1x32xf32>
    %29 = arith.divf %27, %28 : vector<1x32xf32>
    %30 = arith.mulf %25, %25 : vector<8x32xf32>
    %cst_19 = arith.constant dense<0.000000e+00> : vector<32xf32>
    %31 = vector.multi_reduction <add>, %30, %cst_19 [0] : vector<8x32xf32> to vector<32xf32>
    %32 = vector.shape_cast %31 : vector<32xf32> to vector<1x32xf32>
    %cst_20 = arith.constant 8.000000e+00 : f32
    %33 = vector.broadcast %cst_20 : f32 to vector<1x32xf32>
    %34 = arith.divf %32, %33 : vector<1x32xf32>
    %35 = arith.mulf %29, %29 : vector<1x32xf32>
    %36 = arith.subf %34, %35 : vector<1x32xf32>
    %cst_21 = arith.constant 0.000000e+00 : f32
    %37 = vector.broadcast %cst_21 : f32 to vector<1x32xf32>
    %38 = arith.maximumf %36, %37 : vector<1x32xf32>
    %c0_22 = arith.constant 0 : index
    %c0_23 = arith.constant 0 : index
    %39 = vector.load %arg7[%c0_22, %c0_23] : memref<1x32xf32, #tpu.memory_space<vmem>>, vector<1x32xf32>
    %cst_24 = arith.constant 9.99999974E-6 : f32
    %40 = vector.broadcast %cst_24 : f32 to vector<1x32xf32>
    %41 = arith.addf %38, %40 : vector<1x32xf32>
    %42 = math.rsqrt %41 : vector<1x32xf32>
    %43 = arith.mulf %39, %42 : vector<1x32xf32>
    %c0_25 = arith.constant 0 : index
    %c0_26 = arith.constant 0 : index
    %44 = vector.load %arg8[%c0_25, %c0_26] : memref<1x32xf32, #tpu.memory_space<vmem>>, vector<1x32xf32>
    %45 = arith.mulf %29, %43 : vector<1x32xf32>
    %46 = arith.subf %44, %45 : vector<1x32xf32>
    %47 = vector.broadcast %43 : vector<1x32xf32> to vector<8x32xf32>
    %48 = arith.mulf %25, %47 : vector<8x32xf32>
    %49 = vector.broadcast %46 : vector<1x32xf32> to vector<8x32xf32>
    %50 = arith.addf %48, %49 : vector<8x32xf32>
    %cst_27 = arith.constant 0.000000e+00 : f32
    %51 = vector.broadcast %cst_27 : f32 to vector<8x32xf32>
    %52 = arith.maximumf %50, %51 : vector<8x32xf32>
    %c0_28 = arith.constant 0 : index
    %c0_29 = arith.constant 0 : index
    %53 = vector.load %arg9[%c0_28, %c0_29] : memref<32x8xf32, #tpu.memory_space<vmem>>, vector<32x8xf32>
    %54 = arith.truncf %52 : vector<8x32xf32> to vector<8x32xbf16>
    %55 = arith.truncf %53 : vector<32x8xf32> to vector<32x8xbf16>
    %cst_30 = arith.constant dense<0.000000e+00> : vector<8x8xf32>
    %56 = tpu.matmul %54, %55, %cst_30 {dimension_numbers = #tpu.dot_dimension_numbers<[1], [0], [0], [1], [0, 0, 1, 1], [], []>} : vector<8x32xbf16>, vector<32x8xbf16>, vector<8x8xf32> -> vector<8x8xf32>
    %c0_31 = arith.constant 0 : index
    %c0_32 = arith.constant 0 : index
    %57 = vector.load %arg10[%c0_31, %c0_32] : memref<1x8xf32, #tpu.memory_space<vmem>>, vector<1x8xf32>
    %58 = vector.broadcast %57 : vector<1x8xf32> to vector<8x8xf32>
    %59 = arith.addf %56, %58 : vector<8x8xf32>
    %60 = tpu.iota {dimensions = array<i32: 1>} : vector<8x8xi32>
    %c4_i32 = arith.constant 4 : i32
    %61 = vector.broadcast %c4_i32 : i32 to vector<8x8xi32>
    %62 = arith.cmpi slt, %60, %61 : vector<8x8xi32>
    %cst_33 = arith.constant 0xFF800000 : f32
    %cst_34 = arith.constant -2.000000e+01 : f32
    %63 = vector.broadcast %cst_33 : f32 to vector<8x8xf32>
    %64 = vector.broadcast %cst_34 : f32 to vector<8x8xf32>
    %65 = arith.select %62, %63, %64 : vector<8x8xi1>, vector<8x8xf32>
    %cst_35 = arith.constant 0x7F800000 : f32
    %cst_36 = arith.constant 2.000000e+00 : f32
    %66 = vector.broadcast %cst_35 : f32 to vector<8x8xf32>
    %67 = vector.broadcast %cst_36 : f32 to vector<8x8xf32>
    %68 = arith.select %62, %66, %67 : vector<8x8xi1>, vector<8x8xf32>
    %69 = arith.maximumf %65, %59 : vector<8x8xf32>
    %70 = arith.minimumf %68, %69 : vector<8x8xf32>
    %c0_37 = arith.constant 0 : index
    %c0_38 = arith.constant 0 : index
    %71 = vector.load %arg11[%c0_37, %c0_38] : memref<8x8xf32, #tpu.memory_space<vmem>>, vector<8x8xf32>
    tpu.vector_store %arg11[%c0_37, %c0_38], %70 {strides = array<i32>} : memref<8x8xf32, #tpu.memory_space<vmem>>, vector<8x8xf32>,
    return
  }
}

</mosaic_0001>

<llo_original>
// kernel: tpu_custom_call.1
$region0: #{tpu_custom_call.1}
  #allocation0 [shape = 'u32[]', space=smem, size = 0x4, offset = 0x4, fixed_abs, tag = 'smem constant byte address 0x4 - core index']
  #allocation1 [shape = 'u32[144,128]{1,0:T(1,128)}', space=vmem, size = 0x12000, scoped, tag = 'internal scratch']
  %s0 = inlined_call_operand.vmem [shape: f32[8,16], index: 0, kind: input, shape index: {}]
  %s1 = inlined_call_operand.hbm [shape: f32[16,32], index: 1, kind: input, shape index: {}]
  %s2 = inlined_call_operand.vmem [shape: f32[1,32], index: 2, kind: input, shape index: {}]
  %s3 = inlined_call_operand.vmem [shape: f32[32,32], index: 3, kind: input, shape index: {}]
  %s4 = inlined_call_operand.vmem [shape: f32[1,32], index: 4, kind: input, shape index: {}]
  %s5 = inlined_call_operand.hbm [shape: f32[32,32], index: 5, kind: input, shape index: {}]
  %s6 = inlined_call_operand.vmem [shape: f32[1,32], index: 6, kind: input, shape index: {}]
  %s7 = inlined_call_operand.vmem [shape: f32[1,32], index: 7, kind: input, shape index: {}]
  %s8 = inlined_call_operand.vmem [shape: f32[1,32], index: 8, kind: input, shape index: {}]
  %s9 = inlined_call_operand.vmem [shape: f32[32,8], index: 9, kind: input, shape index: {}]
  %s10 = inlined_call_operand.vmem [shape: f32[1,8], index: 10, kind: input, shape index: {}]
  %s11 = inlined_call_operand.hbm [shape: f32[8,8], index: 11, kind: output, shape index: {}]
  %s12 = sld [smem:[#allocation0]]
  $region62: #{tpu_custom_call.1} parent=0
    _
  %s14 = ssub.s32 1, %s12
  %s15 = scalar_select 0, %s14, %s12
  $region1: #{tpu_custom_call.1} parent=0
    #allocation2 [shape = 'u8[8192]{0}', space=vmem, size = 0x2000, scoped, tag = 'input window, operand 1, single buffered']
    #allocation3 [shape = 's32[1]{0}', space=sflag, size = 0x4, scoped, tag = 'scoped memory for tpu_custom_call.1']
    #allocation4 [shape = 's32[1]{0}', space=sflag, size = 0x4, scoped, tag = 'scoped memory for tpu_custom_call.1']
    #allocation5 [shape = 'u8[16384]{0}', space=vmem, size = 0x4000, scoped, tag = 'input window, operand 5, single buffered']
    #allocation6 [shape = 's32[1]{0}', space=sflag, size = 0x4, scoped, tag = 'scoped memory for tpu_custom_call.1']
    #allocation7 [shape = 'u8[4096]{0}', space=vmem, size = 0x1000, scoped, tag = 'output window, operand 0, single buffered']
    %16 = vsyncpa [#allocation3], 0
    %17 = vsyncpa [#allocation6], 0
    %18 = vsyncpa [#allocation4], 0
    // Predicated region
    $region2: #{tpu_custom_call.1} parent=1 // pred_check
      _
    $region3: #{tpu_custom_call.1} parent=1 // pred_check_branch
      %20 = sbr.rel (0) target = $region5
    $region4: #{tpu_custom_call.1} parent=1 // pred_region
      _
    $region5: #{tpu_custom_call.1} parent=1 // pred_fallthru
      _
    // Predicated region
    $region6: #{tpu_custom_call.1} parent=1 // pred_check
      _
    $region7: #{tpu_custom_call.1} parent=1 // pred_check_branch
      %22 = sbr.rel (0) target = $region9
    $region8: #{tpu_custom_call.1} parent=1 // pred_region
      %s24 = ssub.s32 256, 256
      %25 = vsyncadd [#allocation3], %s24
      %s26 = sshll.u32 [#allocation2], 4
      %s27 = int_to_ptr.vmem [resolvable:$true] %s26
      %32 = dma.hbm_to_vmem [thread:$0]  %s1, 256, %s27, [#allocation3], 128, 128, 8
    $region9: #{tpu_custom_call.1} parent=1 // pred_fallthru
      _
    // Predicated region
    $region10: #{tpu_custom_call.1} parent=1 // pred_check
      _
    $region11: #{tpu_custom_call.1} parent=1 // pred_check_branch
      %34 = sbr.rel (0) target = $region13
    $region12: #{tpu_custom_call.1} parent=1 // pred_region
      _
    $region13: #{tpu_custom_call.1} parent=1 // pred_fallthru
      _
    // Predicated region
    $region14: #{tpu_custom_call.1} parent=1 // pred_check
      _
    $region15: #{tpu_custom_call.1} parent=1 // pred_check_branch
      %36 = sbr.rel (0) target = $region17
    $region16: #{tpu_custom_call.1} parent=1 // pred_region
      _
    $region17: #{tpu_custom_call.1} parent=1 // pred_fallthru
      _
    // Predicated region
    $region18: #{tpu_custom_call.1} parent=1 // pred_check
      _
    $region19: #{tpu_custom_call.1} parent=1 // pred_check_branch
      %38 = sbr.rel (0) target = $region21
    $region20: #{tpu_custom_call.1} parent=1 // pred_region
      _
    $region21: #{tpu_custom_call.1} parent=1 // pred_fallthru
      _
    // Predicated region
    $region22: #{tpu_custom_call.1} parent=1 // pred_check
      _
    $region23: #{tpu_custom_call.1} parent=1 // pred_check_branch
      %40 = sbr.rel (0) target = $region25
    $region24: #{tpu_custom_call.1} parent=1 // pred_region
      %s42 = ssub.s32 512, 512
      %43 = vsyncadd [#allocation6], %s42
      %s44 = sshll.u32 [#allocation5], 4
      %s45 = int_to_ptr.vmem [resolvable:$true] %s44
      %50 = dma.hbm_to_vmem [thread:$0]  %s5, 512, %s45, [#allocation6], 128, 128, 8
    $region25: #{tpu_custom_call.1} parent=1 // pred_fallthru
      _
    // Predicated region
    $region26: #{tpu_custom_call.1} parent=1 // pred_check
      _
    $region27: #{tpu_custom_call.1} parent=1 // pred_check_branch
      %52 = sbr.rel (0) target = $region29
    $region28: #{tpu_custom_call.1} parent=1 // pred_region
      _
    $region29: #{tpu_custom_call.1} parent=1 // pred_fallthru
      _
    // Predicated region
    $region30: #{tpu_custom_call.1} parent=1 // pred_check
      _
    $region31: #{tpu_custom_call.1} parent=1 // pred_check_branch
      %54 = sbr.rel (0) target = $region33
    $region32: #{tpu_custom_call.1} parent=1 // pred_region
      _
    $region33: #{tpu_custom_call.1} parent=1 // pred_fallthru
      _
    // Predicated region
    $region34: #{tpu_custom_call.1} parent=1 // pred_check
      _
    $region35: #{tpu_custom_call.1} parent=1 // pred_check_branch
      %56 = sbr.rel (0) target = $region37
    $region36: #{tpu_custom_call.1} parent=1 // pred_region
      _
    $region37: #{tpu_custom_call.1} parent=1 // pred_fallthru
      _
    // Predicated region
    $region38: #{tpu_custom_call.1} parent=1 // pred_check
      _
    $region39: #{tpu_custom_call.1} parent=1 // pred_check_branch
      %58 = sbr.rel (0) target = $region41
    $region40: #{tpu_custom_call.1} parent=1 // pred_region
      _
    $region41: #{tpu_custom_call.1} parent=1 // pred_fallthru
      _
    // Predicated region
    $region42: #{tpu_custom_call.1} parent=1 // pred_check
      _
    $region43: #{tpu_custom_call.1} parent=1 // pred_check_branch
      %60 = sbr.rel (0) target = $region45
    $region44: #{tpu_custom_call.1} parent=1 // pred_region
      _
    $region45: #{tpu_custom_call.1} parent=1 // pred_fallthru
      _
    // Predicated region
    $region46: #{tpu_custom_call.1} parent=1 // pred_check
      _
    $region47: #{tpu_custom_call.1} parent=1 // pred_check_branch
      %62 = sbr.rel (0) target = $region49
    $region48: #{tpu_custom_call.1} parent=1 // pred_region
      %63 = dma.done [#allocation3], 256
    $region49: #{tpu_custom_call.1} parent=1 // pred_fallthru
      _
    // Predicated region
    $region50: #{tpu_custom_call.1} parent=1 // pred_check
      _
    $region51: #{tpu_custom_call.1} parent=1 // pred_check_branch
      %65 = sbr.rel (0) target = $region53
    $region52: #{tpu_custom_call.1} parent=1 // pred_region
      %66 = dma.done [#allocation6], 512
    $region53: #{tpu_custom_call.1} parent=1 // pred_fallthru
      _
    %v68 = vld [vmem:[%s0] sm:$0xff]
    %v69 = vld [vmem:[#allocation2] sm:$0xff]
    %v70 = vld [vmem:[#allocation2 + $0x8] sm:$0xff]
    %v71 = vpack.c.bf16 %v68, %v68
    %v72 = vpack.c.bf16 %v70, %v69
    %v73 = vld [vmem:[%s2] sm:$0x1]
    %v75 = vlaneseq
    %v76 = vshrl.u32 %v75, 7
    %v77 = vsub.s32 0, %v76
    %v78 = vrot.slane %v73, %v77
    %vm80 = vcmask 130048
    %v82 = vsel %vm80, %v71, 0
    %84 = vmatprep.subr.bf16.mxu0 0
    %85 = vmatpush1.bf16.msra.mxu0 0
    %86 = vmatprep.subr.bf16.mxu0 0
    %87 = vmatpush1.bf16.msra.mxu0 0
    %88 = vmatprep.subr.bf16.mxu0 0
    %89 = vmatpush1.bf16.msra.mxu0 0
    %90 = vmatprep.subr.bf16.mxu0 0
    %91 = vmatpush1.bf16.msra.mxu0 0
    %92 = vmatprep.subr.bf16.mxu0 0
    %93 = vmatpush1.bf16.msra.mxu0 0
    %94 = vmatprep.subr.bf16.mxu0 0
    %95 = vmatpush1.bf16.msra.mxu0 0
    %96 = vmatprep.subr.bf16.mxu0 0
    %97 = vmatpush1.bf16.msra.mxu0 0
    %98 = vmatprep.subr.bf16.mxu0 0
    %99 = vmatpush1.bf16.msra.mxu0 %v72
    %100 = vmatprep.subr.bf16.mxu0 0
    %101 = vmatpush2.bf16.msra.mxu0 0
    %102 = vmatprep.subr.bf16.mxu0 0
    %103 = vmatpush2.bf16.msra.mxu0 0
    %104 = vmatprep.subr.bf16.mxu0 0
    %105 = vmatpush2.bf16.msra.mxu0 0
    %106 = vmatprep.subr.bf16.mxu0 0
    %107 = vmatpush2.bf16.msra.mxu0 0
    %108 = vmatprep.subr.bf16.mxu0 0
    %109 = vmatpush2.bf16.msra.mxu0 0
    %110 = vmatprep.subr.bf16.mxu0 0
    %111 = vmatpush2.bf16.msra.mxu0 0
    %112 = vmatprep.subr.bf16.mxu0 0
    %113 = vmatpush2.bf16.msra.mxu0 0
    %114 = vmatprep.subr.bf16.mxu0 0
    %115 = vmatpush2.bf16.msra.mxu0 0
    %116 = vmatprep.mubr.bf16.mxu0 0
    %117 = vmatmul.mubr.bf16.gmra.mxu0 %v82
    %v118 = vpop.f32.mrf.mxu0
    %v119 = vadd.f32 %v78, %v118
    %v120 = vpop.f32.mrf.mxu0
    %v121 = vpop.f32.mrf.mxu0
    %v122 = vpop.f32.mrf.mxu0
    %123 = vdwg.mxu0
    %v124 = vmax.f32 %v119, 0.0
    %v125 = vld [vmem:[%s3] sm:$0xff]
    %v126 = vld [vmem:[%s3 + $0x8] sm:$0xff]
    %v127 = vld [vmem:[%s3 + $0x10] sm:$0xff]
    %v128 = vld [vmem:[%s3 + $0x18] sm:$0xff]
    %v129 = vpack.c.bf16 %v124, %v124
    %v130 = vpack.c.bf16 %v126, %v125
    %v131 = vpack.c.bf16 %v128, %v127
    %v132 = vld [vmem:[%s4] sm:$0x1]
    %v134 = vlaneseq
    %v135 = vshrl.u32 %v134, 7
    %v136 = vsub.s32 0, %v135
    %v137 = vrot.slane %v132, %v136
    %vm139 = vcmask 261120
    %v141 = vsel %vm139, %v129, 0
    %143 = vmatprep.subr.bf16.mxu0 0
    %144 = vmatpush1.bf16.msra.mxu0 0
    %145 = vmatprep.subr.bf16.mxu0 0
    %146 = vmatpush1.bf16.msra.mxu0 0
    %147 = vmatprep.subr.bf16.mxu0 0
    %148 = vmatpush1.bf16.msra.mxu0 0
    %149 = vmatprep.subr.bf16.mxu0 0
    %150 = vmatpush1.bf16.msra.mxu0 0
    %151 = vmatprep.subr.bf16.mxu0 0
    %152 = vmatpush1.bf16.msra.mxu0 0
    %153 = vmatprep.subr.bf16.mxu0 0
    %154 = vmatpush1.bf16.msra.mxu0 0
    %155 = vmatprep.subr.bf16.mxu0 0
    %156 = vmatpush1.bf16.msra.mxu0 %v131
    %157 = vmatprep.subr.bf16.mxu0 0
    %158 = vmatpush1.bf16.msra.mxu0 %v130
    %159 = vmatprep.subr.bf16.mxu0 0
    %160 = vmatpush2.bf16.msra.mxu0 0
    %161 = vmatprep.subr.bf16.mxu0 0
    %162 = vmatpush2.bf16.msra.mxu0 0
    %163 = vmatprep.subr.bf16.mxu0 0
    %164 = vmatpush2.bf16.msra.mxu0 0
    %165 = vmatprep.subr.bf16.mxu0 0
    %166 = vmatpush2.bf16.msra.mxu0 0
    %167 = vmatprep.subr.bf16.mxu0 0
    %168 = vmatpush2.bf16.msra.mxu0 0
    %169 = vmatprep.subr.bf16.mxu0 0
    %170 = vmatpush2.bf16.msra.mxu0 0
    %171 = vmatprep.subr.bf16.mxu0 0
    %172 = vmatpush2.bf16.msra.mxu0 0
    %173 = vmatprep.subr.bf16.mxu0 0
    %174 = vmatpush2.bf16.msra.mxu0 0
    %175 = vmatprep.mubr.bf16.mxu0 0
    %176 = vmatmul.mubr.bf16.gmra.mxu0 %v141
    %v177 = vpop.f32.mrf.mxu0
    %v178 = vadd.f32 %v137, %v177
    %v179 = vpop.f32.mrf.mxu0
    %v180 = vpop.f32.mrf.mxu0
    %v181 = vpop.f32.mrf.mxu0
    %182 = vdwg.mxu0
    %v183 = vmax.f32 %v178, 0.0
    %v184 = vld [vmem:[#allocation5] sm:$0xff]
    %v185 = vld [vmem:[#allocation5 + $0x8] sm:$0xff]
    %v186 = vld [vmem:[#allocation5 + $0x10] sm:$0xff]
    %v187 = vld [vmem:[#allocation5 + $0x18] sm:$0xff]
    %v188 = vpack.c.bf16 %v183, %v183
    %v189 = vpack.c.bf16 %v185, %v184
    %v190 = vpack.c.bf16 %v187, %v186
    %v191 = vld [vmem:[%s6] sm:$0x1]
    %v193 = vlaneseq
    %v194 = vshrl.u32 %v193, 7
    %v195 = vsub.s32 0, %v194
    %v196 = vrot.slane %v191, %v195
    %v199 = vsel %vm139, %v188, 0
    %201 = vmatprep.subr.bf16.mxu0 0
    %202 = vmatpush1.bf16.msra.mxu0 0
    %203 = vmatprep.subr.bf16.mxu0 0
    %204 = vmatpush1.bf16.msra.mxu0 0
    %205 = vmatprep.subr.bf16.mxu0 0
    %206 = vmatpush1.bf16.msra.mxu0 0
    %207 = vmatprep.subr.bf16.mxu0 0
    %208 = vmatpush1.bf16.msra.mxu0 0
    %209 = vmatprep.subr.bf16.mxu0 0
    %210 = vmatpush1.bf16.msra.mxu0 0
    %211 = vmatprep.subr.bf16.mxu0 0
    %212 = vmatpush1.bf16.msra.mxu0 0
    %213 = vmatprep.subr.bf16.mxu0 0
    %214 = vmatpush1.bf16.msra.mxu0 %v190
    %215 = vmatprep.subr.bf16.mxu0 0
    %216 = vmatpush1.bf16.msra.mxu0 %v189
    %217 = vmatprep.subr.bf16.mxu0 0
    %218 = vmatpush2.bf16.msra.mxu0 0
    %219 = vmatprep.subr.bf16.mxu0 0
    %220 = vmatpush2.bf16.msra.mxu0 0
    %221 = vmatprep.subr.bf16.mxu0 0
    %222 = vmatpush2.bf16.msra.mxu0 0
    %223 = vmatprep.subr.bf16.mxu0 0
    %224 = vmatpush2.bf16.msra.mxu0 0
    %225 = vmatprep.subr.bf16.mxu0 0
    %226 = vmatpush2.bf16.msra.mxu0 0
    %227 = vmatprep.subr.bf16.mxu0 0
    %228 = vmatpush2.bf16.msra.mxu0 0
    %229 = vmatprep.subr.bf16.mxu0 0
    %230 = vmatpush2.bf16.msra.mxu0 0
    %231 = vmatprep.subr.bf16.mxu0 0
    %232 = vmatpush2.bf16.msra.mxu0 0
    %233 = vmatprep.mubr.bf16.mxu0 0
    %234 = vmatmul.mubr.bf16.gmra.mxu0 %v199
    %v235 = vpop.f32.mrf.mxu0
    %v236 = vadd.f32 %v196, %v235
    %v237 = vpop.f32.mrf.mxu0
    %v238 = vpop.f32.mrf.mxu0
    %v239 = vpop.f32.mrf.mxu0
    %240 = vdwg.mxu0
    %v241 = vsel %vm139, %v236, 0.0
    %v242 = vrot.slane %v241, 4
    %v243 = vadd.f32 %v241, %v242
    %v244 = vrot.slane %v243, 2
    %v245 = vadd.f32 %v243, %v244
    %v246 = vrot.slane %v245, 1
    %v247 = vadd.f32 %v245, %v246
    %v248 = vrcp.pop 8.0
    %v249 = vmul.f32 %v247, %v248
    %v250 = vmul.f32 %v236, %v236
    %v251 = vsel %vm139, %v250, 0.0
    %v252 = vrot.slane %v251, 4
    %v253 = vadd.f32 %v251, %v252
    %v254 = vrot.slane %v253, 2
    %v255 = vadd.f32 %v253, %v254
    %v256 = vrot.slane %v255, 1
    %v257 = vadd.f32 %v255, %v256
    %v258 = vmul.f32 %v257, %v248
    %v259 = vmul.f32 %v249, %v249
    %v260 = vsub.f32 %v258, %v259
    %v261 = vmax.f32 %v260, 0.0
    %v262 = vld [vmem:[%s7] sm:$0x1]
    %v263 = vadd.f32 %v261, 1e-05
    %v264 = vrsqrt.pop %v263
    %v265 = vmul.f32 %v262, %v264
    %v266 = vld [vmem:[%s8] sm:$0x1]
    %v267 = vmul.f32 %v249, %v265
    %v268 = vsub.f32 %v266, %v267
    %v270 = vlaneseq
    %v271 = vshrl.u32 %v270, 7
    %v272 = vsub.s32 0, %v271
    %v273 = vrot.slane %v265, %v272
    %v275 = vmul.f32 %v236, %v273
    %v277 = vlaneseq
    %v278 = vshrl.u32 %v277, 7
    %v279 = vsub.s32 0, %v278
    %v280 = vrot.slane %v268, %v279
    %v282 = vadd.f32 %v275, %v280
    %v283 = vmax.f32 %v282, 0.0
    %v284 = vld [vmem:[%s9] sm:$0xff]
    %v285 = vld [vmem:[%s9 + $0x8] sm:$0xff]
    %v286 = vld [vmem:[%s9 + $0x10] sm:$0xff]
    %v287 = vld [vmem:[%s9 + $0x18] sm:$0xff]
    %v288 = vpack.c.bf16 %v283, %v283
    %v289 = vpack.c.bf16 %v285, %v284
    %v290 = vpack.c.bf16 %v287, %v286
    %v291 = vld [vmem:[%s10] sm:$0x1]
    %v293 = vlaneseq
    %v294 = vshrl.u32 %v293, 7
    %v295 = vsub.s32 0, %v294
    %v296 = vrot.slane %v291, %v295
    %v299 = vsel %vm139, %v288, 0
    %301 = vmatprep.subr.bf16.mxu0 0
    %302 = vmatpush1.bf16.msra.mxu0 0
    %303 = vmatprep.subr.bf16.mxu0 0
    %304 = vmatpush1.bf16.msra.mxu0 0
    %305 = vmatprep.subr.bf16.mxu0 0
    %306 = vmatpush1.bf16.msra.mxu0 0
    %307 = vmatprep.subr.bf16.mxu0 0
    %308 = vmatpush1.bf16.msra.mxu0 0
    %309 = vmatprep.subr.bf16.mxu0 0
    %310 = vmatpush1.bf16.msra.mxu0 0
    %311 = vmatprep.subr.bf16.mxu0 0
    %312 = vmatpush1.bf16.msra.mxu0 0
    %313 = vmatprep.subr.bf16.mxu0 0
    %314 = vmatpush1.bf16.msra.mxu0 %v290
    %315 = vmatprep.subr.bf16.mxu0 0
    %316 = vmatpush1.bf16.msra.mxu0 %v289
    %317 = vmatprep.subr.bf16.mxu0 0
    %318 = vmatpush2.bf16.msra.mxu0 0
    %319 = vmatprep.subr.bf16.mxu0 0
    %320 = vmatpush2.bf16.msra.mxu0 0
    %321 = vmatprep.subr.bf16.mxu0 0
    %322 = vmatpush2.bf16.msra.mxu0 0
    %323 = vmatprep.subr.bf16.mxu0 0
    %324 = vmatpush2.bf16.msra.mxu0 0
    %325 = vmatprep.subr.bf16.mxu0 0
    %326 = vmatpush2.bf16.msra.mxu0 0
    %327 = vmatprep.subr.bf16.mxu0 0
    %328 = vmatpush2.bf16.msra.mxu0 0
    %329 = vmatprep.subr.bf16.mxu0 0
    %330 = vmatpush2.bf16.msra.mxu0 0
    %331 = vmatprep.subr.bf16.mxu0 0
    %332 = vmatpush2.bf16.msra.mxu0 0
    %333 = vmatprep.mubr.bf16.mxu0 0
    %334 = vmatmul.mubr.bf16.gmra.mxu0 %v299
    %v335 = vpop.f32.mrf.mxu0
    %v336 = vadd.f32 %v296, %v335
    %v337 = vpop.f32.mrf.mxu0
    %v338 = vpop.f32.mrf.mxu0
    %v339 = vpop.f32.mrf.mxu0
    %340 = vdwg.mxu0
    %v341 = vlaneseq
    %v342 = vand.u32 %v341, 127
    %vm343 = vcmp.lt.s32.totalorder %v342, 4
    %v344 = vsel %vm343, -inf, -20.0
    %v345 = vsel %vm343, inf, 2.0
    %v346 = vmax.f32 %v344, %v336
    %v347 = vmin.f32 %v345, %v346
    %vm348 = vcmask 64512
    %349 = vst.msk [vmem:[#allocation7] sm:$0xff] %vm348, %v347
    // Predicated region
    $region54: #{tpu_custom_call.1} parent=1 // pred_check
      _
    $region55: #{tpu_custom_call.1} parent=1 // pred_check_branch
      %351 = sbr.rel (0) target = $region57
    $region56: #{tpu_custom_call.1} parent=1 // pred_region
      %s353 = ssub.s32 128, 128
      %354 = vsyncadd [#allocation4], %s353
      %s356 = sshll.u32 [#allocation7], 4
      %s357 = int_to_ptr.vmem [resolvable:$true] %s356
      %359 = dma.vmem_to_hbm [thread:$0]  %s357, 128, %s11, [#allocation4]
    $region57: #{tpu_custom_call.1} parent=1 // pred_fallthru
      _
    // Predicated region
    $region58: #{tpu_custom_call.1} parent=1 // pred_check
      _
    $region59: #{tpu_custom_call.1} parent=1 // pred_check_branch
      %361 = sbr.rel (0) target = $region61
    $region60: #{tpu_custom_call.1} parent=1 // pred_region
      %362 = dma.done [#allocation4], 128
    $region61: #{tpu_custom_call.1} parent=1 // pred_fallthru
      _
    %363 = vsyncpa [#allocation3], 1
    %364 = vsyncpa [#allocation6], 1
    %365 = vsyncpa [#allocation4], 1

</llo_original>
